<compile_context>
chip_gen: v7x
topology: tpu7x:2x2x1
jax: 0.10.0
libtpu: 0.0.40
codegen_flags: <defaults>
</compile_context>

<pallas_src>
import functools

import jax
import jax.numpy as jnp
from jax import lax
from jax.experimental import pallas as pl
from jax.experimental.pallas import tpu as pltpu


_SINGLE_SHOT_MAX_ROWS = 1024   # beyond this, switch to the batch-tiled kernel
_DEFAULT_BATCH_TILE = 256      # rows per tile for the tiled path (multiple of 8)


def _ce_and_top1(logits, tgt, C):
    """Shared math: per-row CE term, per-row correctness, both (rows, 1)."""
    rows = logits.shape[0]
    col = lax.broadcasted_iota(jnp.int32, (rows, C), 1)      # class idx per lane
    onehot = col == tgt                                      # (rows, C) bool

    row_max = jnp.max(logits, axis=-1, keepdims=True)        # (rows, 1)
    shifted = logits - row_max
    lse_shift = jnp.log(jnp.sum(jnp.exp(shifted), axis=-1, keepdims=True))
    # target logit gathered from `shifted`: the row_max terms cancel in CE.
    tgt_shift = jnp.sum(jnp.where(onehot, shifted, 0.0), axis=-1, keepdims=True)
    per_example = lse_shift - tgt_shift                      # (rows, 1)

    # top-1: first index achieving the row max (reuse `shifted` vreg).
    is_max = shifted == 0.0
    pred = jnp.min(jnp.where(is_max, col, C), axis=-1, keepdims=True)
    correct = (pred == tgt).astype(jnp.float32)              # (rows, 1)
    return per_example, correct


def _loss_kernel_single(logits_ref, tgt_ref, out_ref, *, inv_b):
    """Whole batch in one VMEM block, no grid. out_ref is (1, 2): [loss, err]."""
    logits = logits_ref[...].astype(jnp.float32)              # (B, C)
    tgt = tgt_ref[...]                                        # (B, 1) int32
    B, C = logits.shape

    per_example, correct = _ce_and_top1(logits, tgt, C)

    loss = jnp.sum(per_example, keepdims=True) * inv_b                     # (1,1)
    err = 100.0 - jnp.sum(correct, keepdims=True) * (100.0 * inv_b)        # (1,1)

    lane = lax.broadcasted_iota(jnp.int32, (1, 2), 1)
    out_ref[...] = jnp.where(lane == 0, loss, err)            # lane0=loss, lane1=err


def _loss_kernel_tiled(logits_ref, tgt_ref, out_ref, *, inv_b):
    """Batch-tiled accumulator variant.  Output block (1,2) is resident across
    the (arbitrary) grid axis and doubles as the accumulator:
      during the scan it holds [sum(per_example), sum(correct)];
      the last step rescales it into [mean CE loss, 100 - accuracy%]."""
    i = pl.program_id(0)

    @pl.when(i == 0)
    def _():
        out_ref[...] = jnp.zeros_like(out_ref)

    logits = logits_ref[...].astype(jnp.float32)              # (TB, C)
    tgt = tgt_ref[...]                                        # (TB, 1) int32
    TB, C = logits.shape
    valid = tgt >= 0                                          # padded rows use -1

    per_example, correct = _ce_and_top1(logits, tgt, C)
    per_example = jnp.where(valid, per_example, 0.0)
    correct = jnp.where(valid, correct, 0.0)

    lane = lax.broadcasted_iota(jnp.int32, (1, 2), 1)
    partial = jnp.where(lane == 0,
                        jnp.sum(per_example, keepdims=True),
                        jnp.sum(correct, keepdims=True))      # (1, 2)
    out_ref[...] += partial

    @pl.when(i == pl.num_programs(0) - 1)
    def _():
        totals = out_ref[...]                                 # [loss_sum, n_correct]
        scale = jnp.where(lane == 0, inv_b, -100.0 * inv_b)
        offset = jnp.where(lane == 0, 0.0, 100.0)
        out_ref[...] = offset + totals * scale


def _single_shot(outputs, tgt2d):
    B, _ = outputs.shape
    kernel = functools.partial(_loss_kernel_single, inv_b=1.0 / B)
    return pl.pallas_call(
        kernel,
        out_shape=jax.ShapeDtypeStruct((1, 2), jnp.float32),
        in_specs=[
            pl.BlockSpec(memory_space=pltpu.MemorySpace.VMEM),
            pl.BlockSpec(memory_space=pltpu.MemorySpace.VMEM),
        ],
        out_specs=pl.BlockSpec(memory_space=pltpu.MemorySpace.VMEM),
    )(outputs, tgt2d)


def _tiled(outputs, tgt2d, tb):
    B, C = outputs.shape
    assert tb % 8 == 0, "batch tile must be a multiple of the f32 sublane (8)"
    n_tiles = pl.cdiv(B, tb)
    pad = n_tiles * tb - B
    if pad:
        outputs = jnp.pad(outputs, ((0, pad), (0, 0)))
        tgt2d = jnp.pad(tgt2d, ((0, pad), (0, 0)), constant_values=-1)

    kernel = functools.partial(_loss_kernel_tiled, inv_b=1.0 / B)
    return pl.pallas_call(
        kernel,
        out_shape=jax.ShapeDtypeStruct((1, 2), jnp.float32),
        grid=(n_tiles,),
        in_specs=[
            pl.BlockSpec((tb, C), lambda i: (i, 0)),
            pl.BlockSpec((tb, 1), lambda i: (i, 0)),
        ],
        out_specs=pl.BlockSpec((1, 2), lambda i: (0, 0)),
        compiler_params=pltpu.CompilerParams(
            dimension_semantics=("arbitrary",),     # output block is an accumulator
            vmem_limit_bytes=32 * 1024 * 1024,      # safe on v7x's smaller VMEM
        ),
    )(outputs, tgt2d)


def cnn_test_loss(outputs, tgt_directions, *, batch_tile=None):
    """outputs: [B, num_deg] float logits; tgt_directions: [B] int labels.

    batch_tile=None -> single-shot kernel for small B, tiled kernel for large B.
    batch_tile=int  -> force the batch-tiled accumulator kernel with that tile.
    """
    B, _ = outputs.shape
    tgt2d = tgt_directions.astype(jnp.int32).reshape(B, 1)

    if batch_tile is None and B <= _SINGLE_SHOT_MAX_ROWS:
        out = _single_shot(outputs, tgt2d)
    else:
        tb = batch_tile if batch_tile is not None else _DEFAULT_BATCH_TILE
        out = _tiled(outputs, tgt2d, tb)

    return {
        "loss_directions": out[0, 0],
        "direction_error": out[0, 1],
    }


def _reference(outputs, tgt):
    """Plain-JAX reference of the PyTorch module forward."""
    logits = outputs.astype(jnp.float32)
    lse = jax.nn.logsumexp(logits, axis=-1)
    tgt_logit = jnp.take_along_axis(logits, tgt[:, None], axis=-1)[:, 0]
    loss = jnp.mean(lse - tgt_logit)
    pred = jnp.argmax(logits, axis=-1)
    acc = 100.0 * jnp.mean((pred == tgt).astype(jnp.float32))
    return {"loss_directions": loss, "direction_error": 100.0 - acc}


def _check(res, ref):
    return bool(
        jnp.allclose(res["loss_directions"], ref["loss_directions"],
                     atol=1e-5, rtol=1e-5)
        and jnp.allclose(res["direction_error"], ref["direction_error"], atol=1e-4)
    )


if __name__ == "__main__":
    key = jax.random.PRNGKey(0)

    # --- small-shape case (module-typical): single-shot, grid-less kernel ---
    batch, num_deg = 8, 16
    k_out, k_tgt, k_out2, k_tgt2 = jax.random.split(key, 4)
    outputs = jax.random.normal(k_out, (batch, num_deg), dtype=jnp.float32)
    # targets: list of dicts each with 'directions' -> emulate the concat here
    tgt_directions = jax.random.randint(k_tgt, (batch,), 0, num_deg, dtype=jnp.int32)

    res_small = cnn_test_loss(outputs, tgt_directions)
    jax.block_until_ready(res_small)
    ok_small = _check(res_small, _reference(outputs, tgt_directions))

    # --- larger, non-tile-multiple batch: exercises the tiled accumulator ---
    batch2 = 200
    outputs2 = jax.random.normal(k_out2, (batch2, num_deg), dtype=jnp.float32)
    tgt2 = jax.random.randint(k_tgt2, (batch2,), 0, num_deg, dtype=jnp.int32)

    res_big = cnn_test_loss(outputs2, tgt2, batch_tile=64)
    jax.block_until_ready(res_big)
    ok_big = _check(res_big, _reference(outputs2, tgt2))

    if ok_small and ok_big:
        print("KERNEL_OK")
    else:
        print("MISMATCH", res_small, res_big)
</pallas_src>

<mosaic_0001>
module attributes {stable_mosaic.version = 11 : i64} {
  func.func @_loss_kernel_single(%arg0: memref<8x16xf32, #tpu.memory_space<vmem>>, %arg1: memref<8x1xi32, #tpu.memory_space<vmem>>, %arg2: memref<1x2xf32, #tpu.memory_space<vmem>>) attributes {dimension_semantics = [], scalar_prefetch = 0 : i64, scratch_operands = 0 : i64, tpu.core_type = #tpu.core_type<tc>} {
    %c0 = arith.constant 0 : index
    %c0_0 = arith.constant 0 : index
    %0 = vector.load %arg0[%c0, %c0_0] : memref<8x16xf32, #tpu.memory_space<vmem>>, vector<8x16xf32>
    %c0_1 = arith.constant 0 : index
    %c0_2 = arith.constant 0 : index
    %1 = vector.load %arg1[%c0_1, %c0_2] : memref<8x1xi32, #tpu.memory_space<vmem>>, vector<8x1xi32>
    %2 = tpu.iota {dimensions = array<i32: 1>} : vector<8x16xi32>
    %3 = vector.broadcast %1 : vector<8x1xi32> to vector<8x16xi32>
    %4 = arith.cmpi eq, %2, %3 : vector<8x16xi32>
    %cst = arith.constant dense<0xFF800000> : vector<8xf32>
    %5 = vector.multi_reduction <maximumf>, %0, %cst [1] : vector<8x16xf32> to vector<8xf32>
    %6 = vector.shape_cast %5 : vector<8xf32> to vector<8x1xf32>
    %7 = vector.broadcast %6 : vector<8x1xf32> to vector<8x16xf32>
    %8 = arith.subf %0, %7 : vector<8x16xf32>
    %9 = math.exp %8 : vector<8x16xf32>
    %cst_3 = arith.constant dense<0.000000e+00> : vector<8xf32>
    %10 = vector.multi_reduction <add>, %9, %cst_3 [1] : vector<8x16xf32> to vector<8xf32>
    %11 = vector.shape_cast %10 : vector<8xf32> to vector<8x1xf32>
    %12 = math.log %11 : vector<8x1xf32>
    %cst_4 = arith.constant 0.000000e+00 : f32
    %13 = vector.broadcast %cst_4 : f32 to vector<8x16xf32>
    %14 = arith.select %4, %8, %13 : vector<8x16xi1>, vector<8x16xf32>
    %cst_5 = arith.constant dense<0.000000e+00> : vector<8xf32>
    %15 = vector.multi_reduction <add>, %14, %cst_5 [1] : vector<8x16xf32> to vector<8xf32>
    %16 = vector.shape_cast %15 : vector<8xf32> to vector<8x1xf32>
    %17 = arith.subf %12, %16 : vector<8x1xf32>
    %cst_6 = arith.constant 0.000000e+00 : f32
    %18 = vector.broadcast %cst_6 : f32 to vector<8x16xf32>
    %19 = arith.cmpf oeq, %8, %18 : vector<8x16xf32>
    %c16_i32 = arith.constant 16 : i32
    %20 = vector.broadcast %c16_i32 : i32 to vector<8x16xi32>
    %21 = arith.select %19, %2, %20 : vector<8x16xi1>, vector<8x16xi32>
    %cst_7 = arith.constant dense<2147483647> : vector<8xi32>
    %22 = vector.multi_reduction <minsi>, %21, %cst_7 [1] : vector<8x16xi32> to vector<8xi32>
    %23 = vector.shape_cast %22 : vector<8xi32> to vector<8x1xi32>
    %24 = arith.cmpi eq, %23, %1 : vector<8x1xi32>
    %25 = arith.extui %24 : vector<8x1xi1> to vector<8x1xi32>
    %26 = arith.sitofp %25 : vector<8x1xi32> to vector<8x1xf32>
    %27 = vector.shape_cast %17 : vector<8x1xf32> to vector<1x8x1xf32>
    %cst_8 = arith.constant dense<0.000000e+00> : vector<1xf32>
    %28 = vector.multi_reduction <add>, %27, %cst_8 [1, 2] : vector<1x8x1xf32> to vector<1xf32>
    %29 = vector.shape_cast %28 : vector<1xf32> to vector<1x1x1xf32>
    %30 = vector.extract %29[0, 0, 0] : f32 from vector<1x1x1xf32>
    %31 = vector.broadcast %30 : f32 to vector<1x1xf32>
    %cst_9 = arith.constant 1.250000e-01 : f32
    %32 = vector.broadcast %cst_9 : f32 to vector<1x1xf32>
    %33 = arith.mulf %31, %32 : vector<1x1xf32>
    %34 = vector.shape_cast %26 : vector<8x1xf32> to vector<1x8x1xf32>
    %cst_10 = arith.constant dense<0.000000e+00> : vector<1xf32>
    %35 = vector.multi_reduction <add>, %34, %cst_10 [1, 2] : vector<1x8x1xf32> to vector<1xf32>
    %36 = vector.shape_cast %35 : vector<1xf32> to vector<1x1x1xf32>
    %37 = vector.extract %36[0, 0, 0] : f32 from vector<1x1x1xf32>
    %38 = vector.broadcast %37 : f32 to vector<1x1xf32>
    %cst_11 = arith.constant 1.250000e+01 : f32
    %39 = vector.broadcast %cst_11 : f32 to vector<1x1xf32>
    %40 = arith.mulf %38, %39 : vector<1x1xf32>
    %cst_12 = arith.constant 1.000000e+02 : f32
    %41 = vector.broadcast %cst_12 : f32 to vector<1x1xf32>
    %42 = arith.subf %41, %40 : vector<1x1xf32>
    %43 = tpu.iota {dimensions = array<i32: 1>} : vector<1x2xi32>
    %c0_i32 = arith.constant 0 : i32
    %44 = vector.broadcast %c0_i32 : i32 to vector<1x2xi32>
    %45 = arith.cmpi eq, %43, %44 : vector<1x2xi32>
    %46 = vector.shape_cast %33 : vector<1x1xf32> to vector<1x1xf32>
    %47 = vector.broadcast %46 : vector<1x1xf32> to vector<1x2xf32>
    %48 = vector.shape_cast %42 : vector<1x1xf32> to vector<1x1xf32>
    %49 = vector.broadcast %48 : vector<1x1xf32> to vector<1x2xf32>
    %50 = arith.select %45, %47, %49 : vector<1x2xi1>, vector<1x2xf32>
    %c0_13 = arith.constant 0 : index
    %c0_14 = arith.constant 0 : index
    %51 = vector.load %arg2[%c0_13, %c0_14] : memref<1x2xf32, #tpu.memory_space<vmem>>, vector<1x2xf32>
    tpu.vector_store %arg2[%c0_13, %c0_14], %50 {strides = array<i32>} : memref<1x2xf32, #tpu.memory_space<vmem>>, vector<1x2xf32>,
    return
  }
}

</mosaic_0001>

<llo_original>
// kernel: tpu_custom_call.1
$region0: #{tpu_custom_call.1}
  #allocation0 [shape = 'u32[]', space=smem, size = 0x4, offset = 0x4, fixed_abs, tag = 'smem constant byte address 0x4 - core index']
  #allocation1 [shape = 'u32[144,128]{1,0:T(1,128)}', space=vmem, size = 0x12000, scoped, tag = 'internal scratch']
  %s0 = inlined_call_operand.vmem [shape: f32[8,16], index: 0, kind: input, shape index: {}]
  %s1 = inlined_call_operand.vmem [shape: s32[8,1], index: 1, kind: input, shape index: {}]
  %s2 = inlined_call_operand.hbm [shape: f32[1,2], index: 2, kind: output, shape index: {}]
  %s3 = sld [smem:[#allocation0]]
  $region18: #{tpu_custom_call.1} parent=0
    _
  %s5 = ssub.s32 1, %s3
  %s6 = scalar_select 0, %s5, %s3
  $region1: #{tpu_custom_call.1} parent=0
    #allocation2 [shape = 'u8[512]{0}', space=vmem, size = 0x400, scoped, tag = 'output window, operand 0, single buffered']
    #allocation3 [shape = 's32[1]{0}', space=sflag, size = 0x4, scoped, tag = 'scoped memory for tpu_custom_call.1']
    %7 = vsyncpa [#allocation3], 0
    // Predicated region
    $region2: #{tpu_custom_call.1} parent=1 // pred_check
      _
    $region3: #{tpu_custom_call.1} parent=1 // pred_check_branch
      %9 = sbr.rel (0) target = $region5
    $region4: #{tpu_custom_call.1} parent=1 // pred_region
      _
    $region5: #{tpu_custom_call.1} parent=1 // pred_fallthru
      _
    // Predicated region
    $region6: #{tpu_custom_call.1} parent=1 // pred_check
      _
    $region7: #{tpu_custom_call.1} parent=1 // pred_check_branch
      %11 = sbr.rel (0) target = $region9
    $region8: #{tpu_custom_call.1} parent=1 // pred_region
      _
    $region9: #{tpu_custom_call.1} parent=1 // pred_fallthru
      _
    %v12 = vld [vmem:[%s0] sm:$0xff]
    %v13 = vld [vmem:[%s1] sm:$0xff]
    %v14 = vlaneseq
    %v15 = vand.u32 %v14, 127
    %16 = vset.pattern.permute.xlu0 0
    %17 = vperm.xlu0 %16, %v13
    %v18 = vpop.permute.xlu0 %17
    %vm19 = vcmp.eq.s32.totalorder %v15, %v18
    %vm20 = vcmask 130048
    %v21 = vsel %vm20, %v12, -inf
    %22 = vmax.xlane.f32.xlu0 %v21
    %v23 = vpop.xlane.xlu0 %22
    %v24 = vsub.f32 %v12, %v23
    %v25 = vmul.f32 %v24, 1.442695
    %v26 = vpow.pop %v25
    %v27 = vsel %vm20, %v26, 0.0
    %28 = vadd.xlane.f32.xlu0 %v27
    %v29 = vpop.xlane.xlu0 %28
    %v30 = vlog2.pop %v29
    %v31 = vmul.f32 %v30, 0.6931472
    %v32 = vsel %vm19, %v24, 0.0
    %v33 = vsel %vm20, %v32, 0.0
    %34 = vadd.xlane.f32.xlu0 %v33
    %v35 = vpop.xlane.xlu0 %34
    %v36 = vsub.f32 %v31, %v35
    %vm37 = vcmp.eq.f32.partialorder %v24, 0.0
    %v38 = vsel %vm37, %v15, 16
    %v39 = vsel %vm20, %v38, 2147483647
    %v40 = vand.u32 %v39, 65535
    %v41 = vshra.s32 %v39, 16
    %v42 = vcvt.s32.f32 %v40
    %v43 = vcvt.s32.f32 %v41
    %44 = vmin.xlane.f32.xlu0 %v43
    %v45 = vpop.xlane.xlu0 %44
    %vm46 = vcmp.eq.f32.partialorder %v43, %v45
    %v47 = vsel %vm46, %v42, inf
    %48 = vmin.xlane.f32.xlu0 %v47
    %v49 = vpop.xlane.xlu0 %48
    %v50 = vcvt.f32.s32 %v49
    %v51 = vcvt.f32.s32 %v45
    %v52 = vshll.u32 %v51, 16
    %v53 = vadd.s32 %v52, %v50
    %vm54 = vcmp.eq.s32.totalorder %v53, %v13
    %v55 = vsel %vm54, 1, 0
    %v56 = vcvt.s32.f32 %v55
    %vm57 = vcmask 7168
    %v58 = vsel %vm57, %v36, 0.0
    %59 = vadd.xlane.f32.xlu0 %v58
    %v60 = vpop.xlane.xlu0 %59
    %v61 = vrot.slane %v60, 4
    %v62 = vadd.f32 %v60, %v61
    %v63 = vrot.slane %v62, 2
    %v64 = vadd.f32 %v62, %v63
    %v65 = vrot.slane %v64, 1
    %v66 = vadd.f32 %v64, %v65
    %s67 = vtos %v66
    %v68 = vstv %s67
    %v69 = vmul.f32 %v68, 0.125
    %v70 = vsel %vm57, %v56, 0.0
    %71 = vadd.xlane.f32.xlu0 %v70
    %v72 = vpop.xlane.xlu0 %71
    %v73 = vrot.slane %v72, 4
    %v74 = vadd.f32 %v72, %v73
    %v75 = vrot.slane %v74, 2
    %v76 = vadd.f32 %v74, %v75
    %v77 = vrot.slane %v76, 1
    %v78 = vadd.f32 %v76, %v77
    %s79 = vtos %v78
    %v80 = vstv %s79
    %v81 = vmul.f32 %v80, 12.5
    %v82 = vsub.f32 100.0, %v81
    %vm83 = vcmp.eq.s32.totalorder %v15, 0
    %v84 = vsel %vm83, %v69, %v82
    %vm85 = vcmask 8192
    %86 = vst.msk [vmem:[#allocation2] sm:$0x1] %vm85, %v84
    // Predicated region
    $region10: #{tpu_custom_call.1} parent=1 // pred_check
      _
    $region11: #{tpu_custom_call.1} parent=1 // pred_check_branch
      %88 = sbr.rel (0) target = $region13
    $region12: #{tpu_custom_call.1} parent=1 // pred_region
      %s90 = ssub.s32 16, 16
      %91 = vsyncadd [#allocation3], %s90
      %s93 = sshll.u32 [#allocation2], 4
      %s94 = int_to_ptr.vmem [resolvable:$true] %s93
      %96 = dma.vmem_to_hbm [thread:$0]  %s94, 16, %s2, [#allocation3]
    $region13: #{tpu_custom_call.1} parent=1 // pred_fallthru
      _
    // Predicated region
    $region14: #{tpu_custom_call.1} parent=1 // pred_check
      _
    $region15: #{tpu_custom_call.1} parent=1 // pred_check_branch
      %98 = sbr.rel (0) target = $region17
    $region16: #{tpu_custom_call.1} parent=1 // pred_region
      %99 = dma.done [#allocation3], 16
    $region17: #{tpu_custom_call.1} parent=1 // pred_fallthru
      _
    %100 = vsyncpa [#allocation3], 1

</llo_original>
